<compile_context>
chip_gen: v7x
topology: tpu7x:2x2x1
jax: 0.10.0
libtpu: 0.0.40
codegen_flags: <defaults>
</compile_context>

<pallas_src>
import jax
import jax.numpy as jnp
from jax.experimental import pallas as pl
from jax.experimental.pallas import tpu as pltpu

# ---- problem sizes (Tennis env: state=24, action=2, 2 agents) ----------
STATE_SIZE = 24
ACTION_SIZE = 2
NUM_AGENTS = 2
FCS1_UNITS = 200
FC2_UNITS = 150

S_IN = STATE_SIZE * NUM_AGENTS          # 48
A_IN = ACTION_SIZE * NUM_AGENTS         # 4
IN_DIM = S_IN + A_IN                    # 52

# padded (lane-aligned) sizes used inside the kernel
H1_PAD = 256                            # 200 -> 256
H2_PAD = 256                            # 150 -> 256
OUT_PAD = 128                           # 1   -> 128 (lane-dense store)

DEFAULT_BATCH_TILE = 256                # fits easily in v7x's 32 MiB scoped VMEM


def _round_up(x, m):
    return (x + m - 1) // m * m


def critic_kernel(s_ref, a_ref, w1s_ref, w1a_ref, b1_ref,
                  w2_ref, b2_ref, w3_ref, b3_ref, out_ref):
    """3-layer MLP tile: bf16 matmuls on the MXU, f32 accumulate + bias + ReLU."""
    s = s_ref[...]                                        # (TB, 48) bf16
    a = a_ref[...]                                        # (TB, 4)  bf16

    # fcs1: xs @ W1 == s @ W1[:48] + a @ W1[48:]  (concat eliminated)
    h1 = jnp.dot(s, w1s_ref[...], preferred_element_type=jnp.float32)
    h1 = h1 + jnp.dot(a, w1a_ref[...], preferred_element_type=jnp.float32)
    h1 = jnp.maximum(h1 + b1_ref[...], 0.0)               # (TB, 256) f32
    h1 = h1.astype(jnp.bfloat16)

    # fc2
    h2 = jnp.dot(h1, w2_ref[...], preferred_element_type=jnp.float32)
    h2 = jnp.maximum(h2 + b2_ref[...], 0.0)               # (TB, 256) f32
    h2 = h2.astype(jnp.bfloat16)

    # fc3 (kept as a matmul against the zero-padded (256,128) W3 so the
    # output store is unmasked / lane-dense; real q lives in column 0)
    q = jnp.dot(h2, w3_ref[...], preferred_element_type=jnp.float32)
    out_ref[...] = (q + b3_ref[...]).astype(out_ref.dtype)


def critic_forward(state, action, packed_params, *,
                   max_batch_tile=DEFAULT_BATCH_TILE):
    """state: (B, 48) f32, action: (B, 4) f32 -> q: (B, 1) f32."""
    w1s, w1a, b1, w2, b2, w3, b3 = packed_params
    b = state.shape[0]

    # batch tile: large batches use TB=256 (pipelined grid); small batches use
    # one sublane-aligned tile.
    tb = max_batch_tile if b >= max_batch_tile else max(8, _round_up(b, 8))
    b_pad = _round_up(b, tb)

    s = state.astype(jnp.bfloat16)
    a = action.astype(jnp.bfloat16)
    if b_pad != b:
        s = jnp.pad(s, ((0, b_pad - b), (0, 0)))
        a = jnp.pad(a, ((0, b_pad - b), (0, 0)))

    q_pad = pl.pallas_call(
        critic_kernel,
        out_shape=jax.ShapeDtypeStruct((b_pad, OUT_PAD), jnp.float32),
        grid_spec=pl.GridSpec(
            grid=(b_pad // tb,),
            in_specs=[
                # activations: march over the batch
                pl.BlockSpec((tb, S_IN), lambda i: (i, 0)),
                pl.BlockSpec((tb, A_IN), lambda i: (i, 0)),
                # weights / biases: resident in VMEM (block index constant)
                pl.BlockSpec((S_IN, H1_PAD), lambda i: (0, 0)),
                pl.BlockSpec((A_IN, H1_PAD), lambda i: (0, 0)),
                pl.BlockSpec((1, H1_PAD), lambda i: (0, 0)),
                pl.BlockSpec((H1_PAD, H2_PAD), lambda i: (0, 0)),
                pl.BlockSpec((1, H2_PAD), lambda i: (0, 0)),
                pl.BlockSpec((H2_PAD, OUT_PAD), lambda i: (0, 0)),
                pl.BlockSpec((1, OUT_PAD), lambda i: (0, 0)),
            ],
            out_specs=pl.BlockSpec((tb, OUT_PAD), lambda i: (i, 0)),
        ),
        compiler_params=pltpu.CompilerParams(
            dimension_semantics=("parallel",)),
    )(s, a, w1s, w1a, b1, w2, b2, w3, b3)

    return q_pad[:b, :1]


def init_params(key):
    """Raw f32 params mirroring the PyTorch reset_parameters ranges.

    Note: `hidden_init` in the reference uses weight.size()[0] (= out_features)
    for fan-in; we reproduce that exact behaviour.  Weights are stored
    transposed as (in_features, out_features).
    """
    k1, k2, k3, k4, k5, k6 = jax.random.split(key, 6)

    lim1 = 1.0 / jnp.sqrt(FCS1_UNITS)       # hidden_init(fcs1): size()[0] = 200
    lim2 = 1.0 / jnp.sqrt(FC2_UNITS)        # hidden_init(fc2):  size()[0] = 150
    lim3 = 0.003

    w1 = jax.random.uniform(k1, (IN_DIM, FCS1_UNITS), jnp.float32, -lim1, lim1)
    w2 = jax.random.uniform(k2, (FCS1_UNITS, FC2_UNITS), jnp.float32, -lim2, lim2)
    w3 = jax.random.uniform(k3, (FC2_UNITS, 1), jnp.float32, -lim3, lim3)

    # biases: PyTorch Linear default uniform(-1/sqrt(in_features), +...)
    bl1 = 1.0 / jnp.sqrt(IN_DIM)
    bl2 = 1.0 / jnp.sqrt(FCS1_UNITS)
    bl3 = 1.0 / jnp.sqrt(FC2_UNITS)
    b1 = jax.random.uniform(k4, (FCS1_UNITS,), jnp.float32, -bl1, bl1)
    b2 = jax.random.uniform(k5, (FC2_UNITS,), jnp.float32, -bl2, bl2)
    b3 = jax.random.uniform(k6, (1,), jnp.float32, -bl3, bl3)

    return (w1, b1, w2, b2, w3, b3)


def pack_params(raw_params):
    """Zero-pad to lane-aligned shapes, split W1, cast weights to bf16 (once)."""
    w1, b1, w2, b2, w3, b3 = raw_params

    def pad2(x, rows, cols):
        return jnp.pad(x, ((0, rows - x.shape[0]), (0, cols - x.shape[1])))

    w1s = pad2(w1[:S_IN], S_IN, H1_PAD).astype(jnp.bfloat16)      # (48, 256)
    w1a = pad2(w1[S_IN:], A_IN, H1_PAD).astype(jnp.bfloat16)      # (4, 256)
    b1p = pad2(b1[None, :], 1, H1_PAD)                            # (1, 256) f32
    w2p = pad2(w2, H1_PAD, H2_PAD).astype(jnp.bfloat16)           # (256, 256)
    b2p = pad2(b2[None, :], 1, H2_PAD)                            # (1, 256) f32
    w3p = pad2(w3, H2_PAD, OUT_PAD).astype(jnp.bfloat16)          # (256, 128)
    b3p = pad2(b3[None, :], 1, OUT_PAD)                           # (1, 128) f32
    return (w1s, w1a, b1p, w2p, b2p, w3p, b3p)


def critic_reference(state, action, raw_params):
    """Pure-JAX reference mirroring the kernel's bf16 matmul inputs."""
    w1, b1, w2, b2, w3, b3 = raw_params
    bf = lambda x: x.astype(jnp.bfloat16).astype(jnp.float32)
    xs = jnp.concatenate([state, action], axis=1)
    h1 = jnp.maximum(bf(xs) @ bf(w1) + b1[None, :], 0.0)
    h2 = jnp.maximum(bf(h1) @ bf(w2) + b2[None, :], 0.0)
    return bf(h2) @ bf(w3) + b3[None, :]


if __name__ == "__main__":
    key = jax.random.PRNGKey(0)
    kp, ks, ka = jax.random.split(key, 3)

    batch = 8
    raw_params = init_params(kp)
    packed_params = pack_params(raw_params)

    state = jax.random.normal(ks, (batch, S_IN), jnp.float32)
    action = jax.random.uniform(ka, (batch, A_IN), jnp.float32, -1.0, 1.0)

    q = critic_forward(state, action, packed_params)
    q = jax.block_until_ready(q)

    q_ref = critic_reference(state, action, raw_params)
    assert q.shape == (batch, 1)
    assert jnp.allclose(q, q_ref, atol=2e-2, rtol=2e-2)

    print("KERNEL_OK")
</pallas_src>

<mosaic_0001>
module attributes {stable_mosaic.version = 11 : i64} {
  func.func @critic_kernel(%arg0: i32, %arg1: memref<8x48xbf16, #tpu.memory_space<vmem>>, %arg2: memref<8x4xbf16, #tpu.memory_space<vmem>>, %arg3: memref<48x256xbf16, #tpu.memory_space<vmem>>, %arg4: memref<4x256xbf16, #tpu.memory_space<vmem>>, %arg5: memref<1x256xf32, #tpu.memory_space<vmem>>, %arg6: memref<256x256xbf16, #tpu.memory_space<vmem>>, %arg7: memref<1x256xf32, #tpu.memory_space<vmem>>, %arg8: memref<256x128xbf16, #tpu.memory_space<vmem>>, %arg9: memref<1x128xf32, #tpu.memory_space<vmem>>, %arg10: memref<8x128xf32, #tpu.memory_space<vmem>>) attributes {dimension_semantics = [#tpu.dimension_semantics<parallel>], iteration_bounds = array<i64: 1>, scalar_prefetch = 0 : i64, scratch_operands = 0 : i64, tpu.core_type = #tpu.core_type<tc>, window_params = [{transform_indices = @transform_0, window_bounds = array<i64: 8, 48>}, {transform_indices = @transform_1, window_bounds = array<i64: 8, 4>}, {pipeline_mode = #tpu.pipeline_mode<synchronous>, transform_indices = @transform_2, window_bounds = array<i64: 48, 256>}, {pipeline_mode = #tpu.pipeline_mode<synchronous>, transform_indices = @transform_3, window_bounds = array<i64: 4, 256>}, {pipeline_mode = #tpu.pipeline_mode<synchronous>, transform_indices = @transform_4, window_bounds = array<i64: 1, 256>}, {pipeline_mode = #tpu.pipeline_mode<synchronous>, transform_indices = @transform_5, window_bounds = array<i64: 256, 256>}, {pipeline_mode = #tpu.pipeline_mode<synchronous>, transform_indices = @transform_6, window_bounds = array<i64: 1, 256>}, {pipeline_mode = #tpu.pipeline_mode<synchronous>, transform_indices = @transform_7, window_bounds = array<i64: 256, 128>}, {pipeline_mode = #tpu.pipeline_mode<synchronous>, transform_indices = @transform_8, window_bounds = array<i64: 1, 128>}, {transform_indices = @transform_9, window_bounds = array<i64: 8, 128>}]} {
    %c0 = arith.constant 0 : index
    %c0_0 = arith.constant 0 : index
    %0 = vector.load %arg1[%c0, %c0_0] : memref<8x48xbf16, #tpu.memory_space<vmem>>, vector<8x48xbf16>
    %c0_1 = arith.constant 0 : index
    %c0_2 = arith.constant 0 : index
    %1 = vector.load %arg2[%c0_1, %c0_2] : memref<8x4xbf16, #tpu.memory_space<vmem>>, vector<8x4xbf16>
    %c0_3 = arith.constant 0 : index
    %c0_4 = arith.constant 0 : index
    %2 = vector.load %arg3[%c0_3, %c0_4] : memref<48x256xbf16, #tpu.memory_space<vmem>>, vector<48x256xbf16>
    %cst = arith.constant dense<0.000000e+00> : vector<8x256xf32>
    %3 = tpu.matmul %0, %2, %cst {dimension_numbers = #tpu.dot_dimension_numbers<[1], [0], [0], [1], [0, 0, 1, 1], [], []>} : vector<8x48xbf16>, vector<48x256xbf16>, vector<8x256xf32> -> vector<8x256xf32>
    %c0_5 = arith.constant 0 : index
    %c0_6 = arith.constant 0 : index
    %4 = vector.load %arg4[%c0_5, %c0_6] : memref<4x256xbf16, #tpu.memory_space<vmem>>, vector<4x256xbf16>
    %cst_7 = arith.constant dense<0.000000e+00> : vector<8x256xf32>
    %5 = tpu.matmul %1, %4, %cst_7 {dimension_numbers = #tpu.dot_dimension_numbers<[1], [0], [0], [1], [0, 0, 1, 1], [], []>} : vector<8x4xbf16>, vector<4x256xbf16>, vector<8x256xf32> -> vector<8x256xf32>
    %6 = arith.addf %3, %5 : vector<8x256xf32>
    %c0_8 = arith.constant 0 : index
    %c0_9 = arith.constant 0 : index
    %7 = vector.load %arg5[%c0_8, %c0_9] : memref<1x256xf32, #tpu.memory_space<vmem>>, vector<1x256xf32>
    %8 = vector.broadcast %7 : vector<1x256xf32> to vector<8x256xf32>
    %9 = arith.addf %6, %8 : vector<8x256xf32>
    %cst_10 = arith.constant 0.000000e+00 : f32
    %10 = vector.broadcast %cst_10 : f32 to vector<8x256xf32>
    %11 = arith.maximumf %9, %10 : vector<8x256xf32>
    %12 = arith.truncf %11 : vector<8x256xf32> to vector<8x256xbf16>
    %c0_11 = arith.constant 0 : index
    %c0_12 = arith.constant 0 : index
    %13 = vector.load %arg6[%c0_11, %c0_12] : memref<256x256xbf16, #tpu.memory_space<vmem>>, vector<256x256xbf16>
    %cst_13 = arith.constant dense<0.000000e+00> : vector<8x256xf32>
    %14 = tpu.matmul %12, %13, %cst_13 {dimension_numbers = #tpu.dot_dimension_numbers<[1], [0], [0], [1], [0, 0, 1, 1], [], []>} : vector<8x256xbf16>, vector<256x256xbf16>, vector<8x256xf32> -> vector<8x256xf32>
    %c0_14 = arith.constant 0 : index
    %c0_15 = arith.constant 0 : index
    %15 = vector.load %arg7[%c0_14, %c0_15] : memref<1x256xf32, #tpu.memory_space<vmem>>, vector<1x256xf32>
    %16 = vector.broadcast %15 : vector<1x256xf32> to vector<8x256xf32>
    %17 = arith.addf %14, %16 : vector<8x256xf32>
    %cst_16 = arith.constant 0.000000e+00 : f32
    %18 = vector.broadcast %cst_16 : f32 to vector<8x256xf32>
    %19 = arith.maximumf %17, %18 : vector<8x256xf32>
    %20 = arith.truncf %19 : vector<8x256xf32> to vector<8x256xbf16>
    %c0_17 = arith.constant 0 : index
    %c0_18 = arith.constant 0 : index
    %21 = vector.load %arg8[%c0_17, %c0_18] : memref<256x128xbf16, #tpu.memory_space<vmem>>, vector<256x128xbf16>
    %cst_19 = arith.constant dense<0.000000e+00> : vector<8x128xf32>
    %22 = tpu.matmul %20, %21, %cst_19 {dimension_numbers = #tpu.dot_dimension_numbers<[1], [0], [0], [1], [0, 0, 1, 1], [], []>} : vector<8x256xbf16>, vector<256x128xbf16>, vector<8x128xf32> -> vector<8x128xf32>
    %c0_20 = arith.constant 0 : index
    %c0_21 = arith.constant 0 : index
    %23 = vector.load %arg9[%c0_20, %c0_21] : memref<1x128xf32, #tpu.memory_space<vmem>>, vector<1x128xf32>
    %24 = vector.broadcast %23 : vector<1x128xf32> to vector<8x128xf32>
    %25 = arith.addf %22, %24 : vector<8x128xf32>
    %c0_22 = arith.constant 0 : index
    %c0_23 = arith.constant 0 : index
    %26 = vector.load %arg10[%c0_22, %c0_23] : memref<8x128xf32, #tpu.memory_space<vmem>>, vector<8x128xf32>
    tpu.vector_store %arg10[%c0_22, %c0_23], %25 {strides = array<i32>} : memref<8x128xf32, #tpu.memory_space<vmem>>, vector<8x128xf32>,
    return
  }
  func.func @transform_0(%arg0: i32) -> (i32, i32) {
    %c0_i32 = arith.constant 0 : i32
    %c0_i32_0 = arith.constant 0 : i32
    return %arg0, %c0_i32 : i32, i32
  }
  func.func @transform_1(%arg0: i32) -> (i32, i32) {
    %c0_i32 = arith.constant 0 : i32
    %c0_i32_0 = arith.constant 0 : i32
    return %arg0, %c0_i32 : i32, i32
  }
  func.func @transform_2(%arg0: i32) -> (i32, i32) {
    %c0_i32 = arith.constant 0 : i32
    %c0_i32_0 = arith.constant 0 : i32
    %c0_i32_1 = arith.constant 0 : i32
    return %c0_i32, %c0_i32_0 : i32, i32
  }
  func.func @transform_3(%arg0: i32) -> (i32, i32) {
    %c0_i32 = arith.constant 0 : i32
    %c0_i32_0 = arith.constant 0 : i32
    %c0_i32_1 = arith.constant 0 : i32
    return %c0_i32, %c0_i32_0 : i32, i32
  }
  func.func @transform_4(%arg0: i32) -> (i32, i32) {
    %c0_i32 = arith.constant 0 : i32
    %c0_i32_0 = arith.constant 0 : i32
    %c0_i32_1 = arith.constant 0 : i32
    return %c0_i32, %c0_i32_0 : i32, i32
  }
  func.func @transform_5(%arg0: i32) -> (i32, i32) {
    %c0_i32 = arith.constant 0 : i32
    %c0_i32_0 = arith.constant 0 : i32
    %c0_i32_1 = arith.constant 0 : i32
    return %c0_i32, %c0_i32_0 : i32, i32
  }
  func.func @transform_6(%arg0: i32) -> (i32, i32) {
    %c0_i32 = arith.constant 0 : i32
    %c0_i32_0 = arith.constant 0 : i32
    %c0_i32_1 = arith.constant 0 : i32
    return %c0_i32, %c0_i32_0 : i32, i32
  }
  func.func @transform_7(%arg0: i32) -> (i32, i32) {
    %c0_i32 = arith.constant 0 : i32
    %c0_i32_0 = arith.constant 0 : i32
    %c0_i32_1 = arith.constant 0 : i32
    return %c0_i32, %c0_i32_0 : i32, i32
  }
  func.func @transform_8(%arg0: i32) -> (i32, i32) {
    %c0_i32 = arith.constant 0 : i32
    %c0_i32_0 = arith.constant 0 : i32
    %c0_i32_1 = arith.constant 0 : i32
    return %c0_i32, %c0_i32_0 : i32, i32
  }
  func.func @transform_9(%arg0: i32) -> (i32, i32) {
    %c0_i32 = arith.constant 0 : i32
    %c0_i32_0 = arith.constant 0 : i32
    return %arg0, %c0_i32 : i32, i32
  }
}

</mosaic_0001>

<llo_original>
// kernel: tpu_custom_call.1
$region0: #{tpu_custom_call.1}
  #allocation0 [shape = 'u32[]', space=smem, size = 0x4, offset = 0x4, fixed_abs, tag = 'smem constant byte address 0x4 - core index']
  #allocation1 [shape = 'u32[144,128]{1,0:T(1,128)}', space=vmem, size = 0x12000, scoped, tag = 'internal scratch']
  %s0 = inlined_call_operand.vmem [shape: bf16[8,48], index: 0, kind: input, shape index: {}]
  %s1 = inlined_call_operand.vmem [shape: bf16[8,4], index: 1, kind: input, shape index: {}]
  %s2 = inlined_call_operand.hbm [shape: bf16[48,256], index: 2, kind: input, shape index: {}]
  %s3 = inlined_call_operand.vmem [shape: bf16[4,256], index: 3, kind: input, shape index: {}]
  %s4 = inlined_call_operand.vmem [shape: f32[1,256], index: 4, kind: input, shape index: {}]
  %s5 = inlined_call_operand.hbm [shape: bf16[256,256], index: 5, kind: input, shape index: {}]
  %s6 = inlined_call_operand.vmem [shape: f32[1,256], index: 6, kind: input, shape index: {}]
  %s7 = inlined_call_operand.hbm [shape: bf16[256,128], index: 7, kind: input, shape index: {}]
  %s8 = inlined_call_operand.vmem [shape: f32[1,128], index: 8, kind: input, shape index: {}]
  %s9 = inlined_call_operand.hbm [shape: f32[8,128], index: 9, kind: output, shape index: {}]
  %s10 = sld [smem:[#allocation0]]
  $region58: #{tpu_custom_call.1} parent=0
    _
  %s12 = ssub.s32 1, %s10
  %s13 = scalar_select 0, %s12, %s10
  $region1: #{tpu_custom_call.1} parent=0
    #allocation2 [shape = 'u8[24576]{0}', space=vmem, size = 0x6000, scoped, tag = 'input window, operand 2, single buffered']
    #allocation3 [shape = 's32[1]{0}', space=sflag, size = 0x4, scoped, tag = 'scoped memory for tpu_custom_call.1']
    #allocation4 [shape = 's32[1]{0}', space=sflag, size = 0x4, scoped, tag = 'scoped memory for tpu_custom_call.1']
    #allocation5 [shape = 'u8[131072]{0}', space=vmem, size = 0x20000, scoped, tag = 'input window, operand 5, single buffered']
    #allocation6 [shape = 's32[1]{0}', space=sflag, size = 0x4, scoped, tag = 'scoped memory for tpu_custom_call.1']
    #allocation7 [shape = 'u8[65536]{0}', space=vmem, size = 0x10000, scoped, tag = 'input window, operand 7, single buffered']
    #allocation8 [shape = 'u8[4096]{0}', space=vmem, size = 0x1000, scoped, tag = 'output window, operand 0, single buffered']
    %14 = vsyncpa [#allocation3], 0
    %15 = vsyncpa [#allocation6], 0
    %16 = vsyncpa [#allocation4], 0
    // Predicated region
    $region2: #{tpu_custom_call.1} parent=1 // pred_check
      _
    $region3: #{tpu_custom_call.1} parent=1 // pred_check_branch
      %18 = sbr.rel (0) target = $region5
    $region4: #{tpu_custom_call.1} parent=1 // pred_region
      _
    $region5: #{tpu_custom_call.1} parent=1 // pred_fallthru
      _
    // Predicated region
    $region6: #{tpu_custom_call.1} parent=1 // pred_check
      _
    $region7: #{tpu_custom_call.1} parent=1 // pred_check_branch
      %20 = sbr.rel (0) target = $region9
    $region8: #{tpu_custom_call.1} parent=1 // pred_region
      _
    $region9: #{tpu_custom_call.1} parent=1 // pred_fallthru
      _
    // Predicated region
    $region10: #{tpu_custom_call.1} parent=1 // pred_check
      _
    $region11: #{tpu_custom_call.1} parent=1 // pred_check_branch
      %22 = sbr.rel (0) target = $region13
    $region12: #{tpu_custom_call.1} parent=1 // pred_region
      %s24 = ssub.s32 768, 768
      %25 = vsyncadd [#allocation3], %s24
      %s26 = sshll.u32 [#allocation2], 4
      %s27 = int_to_ptr.vmem [resolvable:$true] %s26
      %32 = dma.hbm_to_vmem [thread:$0]  %s2, 768, %s27, [#allocation3], 128, 128, 8
    $region13: #{tpu_custom_call.1} parent=1 // pred_fallthru
      _
    // Predicated region
    $region14: #{tpu_custom_call.1} parent=1 // pred_check
      _
    $region15: #{tpu_custom_call.1} parent=1 // pred_check_branch
      %34 = sbr.rel (0) target = $region17
    $region16: #{tpu_custom_call.1} parent=1 // pred_region
      _
    $region17: #{tpu_custom_call.1} parent=1 // pred_fallthru
      _
    // Predicated region
    $region18: #{tpu_custom_call.1} parent=1 // pred_check
      _
    $region19: #{tpu_custom_call.1} parent=1 // pred_check_branch
      %36 = sbr.rel (0) target = $region21
    $region20: #{tpu_custom_call.1} parent=1 // pred_region
      _
    $region21: #{tpu_custom_call.1} parent=1 // pred_fallthru
      _
    // Predicated region
    $region22: #{tpu_custom_call.1} parent=1 // pred_check
      _
    $region23: #{tpu_custom_call.1} parent=1 // pred_check_branch
      %38 = sbr.rel (0) target = $region25
    $region24: #{tpu_custom_call.1} parent=1 // pred_region
      %s40 = ssub.s32 4096, 4096
      %41 = vsyncadd [#allocation6], %s40
      %s42 = sshll.u32 [#allocation5], 4
      %s43 = int_to_ptr.vmem [resolvable:$true] %s42
      %48 = dma.hbm_to_vmem [thread:$0]  %s5, 4096, %s43, [#allocation6], 128, 128, 8
    $region25: #{tpu_custom_call.1} parent=1 // pred_fallthru
      _
    // Predicated region
    $region26: #{tpu_custom_call.1} parent=1 // pred_check
      _
    $region27: #{tpu_custom_call.1} parent=1 // pred_check_branch
      %50 = sbr.rel (0) target = $region29
    $region28: #{tpu_custom_call.1} parent=1 // pred_region
      _
    $region29: #{tpu_custom_call.1} parent=1 // pred_fallthru
      _
    // Predicated region
    $region30: #{tpu_custom_call.1} parent=1 // pred_check
      _
    $region31: #{tpu_custom_call.1} parent=1 // pred_check_branch
      %52 = sbr.rel (0) target = $region33
    $region32: #{tpu_custom_call.1} parent=1 // pred_region
      %s54 = ssub.s32 2048, 2048
      %55 = vsyncadd [#allocation6], %s54
      %s56 = sshll.u32 [#allocation7], 4
      %s57 = int_to_ptr.vmem [resolvable:$true] %s56
      %62 = dma.hbm_to_vmem [thread:$0]  %s7, 2048, %s57, [#allocation6], 64, 64, 4
    $region33: #{tpu_custom_call.1} parent=1 // pred_fallthru
      _
    // Predicated region
    $region34: #{tpu_custom_call.1} parent=1 // pred_check
      _
    $region35: #{tpu_custom_call.1} parent=1 // pred_check_branch
      %64 = sbr.rel (0) target = $region37
    $region36: #{tpu_custom_call.1} parent=1 // pred_region
      _
    $region37: #{tpu_custom_call.1} parent=1 // pred_fallthru
      _
    // Predicated region
    $region38: #{tpu_custom_call.1} parent=1 // pred_check
      _
    $region39: #{tpu_custom_call.1} parent=1 // pred_check_branch
      %66 = sbr.rel (0) target = $region41
    $region40: #{tpu_custom_call.1} parent=1 // pred_region
      %67 = dma.done [#allocation3], 768
    $region41: #{tpu_custom_call.1} parent=1 // pred_fallthru
      _
    // Predicated region
    $region42: #{tpu_custom_call.1} parent=1 // pred_check
      _
    $region43: #{tpu_custom_call.1} parent=1 // pred_check_branch
      %69 = sbr.rel (0) target = $region45
    $region44: #{tpu_custom_call.1} parent=1 // pred_region
      %70 = dma.done [#allocation6], 4096
    $region45: #{tpu_custom_call.1} parent=1 // pred_fallthru
      _
    // Predicated region
    $region46: #{tpu_custom_call.1} parent=1 // pred_check
      _
    $region47: #{tpu_custom_call.1} parent=1 // pred_check_branch
      %72 = sbr.rel (0) target = $region49
    $region48: #{tpu_custom_call.1} parent=1 // pred_region
      %73 = dma.done [#allocation6], 2048
    $region49: #{tpu_custom_call.1} parent=1 // pred_fallthru
      _
    %v75 = vld [vmem:[%s0] sm:$0xf]
    %v76 = vld [vmem:[%s1] sm:$0xf]
    %v77 = vld [vmem:[#allocation2] sm:$0xff]
    %v78 = vld [vmem:[#allocation2 + $0x8] sm:$0xff]
    %v79 = vld [vmem:[#allocation2 + $0x10] sm:$0xff]
    %v80 = vld [vmem:[#allocation2 + $0x18] sm:$0xff]
    %v81 = vld [vmem:[#allocation2 + $0x20] sm:$0xff]
    %v82 = vld [vmem:[#allocation2 + $0x28] sm:$0xff]
    %v83 = vld [vmem:[%s3] sm:$0xf]
    %v86 = vunpack.c.l.s4 1983009808
    %v87 = vunpack.c.0.s8 %v86
    %v88 = vlaneseq
    %v89 = vshrl.u32 %v88, 7
    %v90 = vsub.s32 %v87, %v89
    %v91 = vrot.slane %v83, %v90
    %v92 = vcombine.high %v91, %v91
    %vm93 = vcmask 31744
    %v95 = vsel %vm93, %v76, 0
    %vm97 = vcmask 1041408
    %v99 = vsel %vm97, %v91, 0
    %v102 = vsel %vm97, %v92, 0
    %104 = vmatprep.subr.bf16.mxu0 %v102
    %105 = vmatpush1.bf16.msra.mxu0 %v99
    %106 = vmatprep.subr.bf16.mxu0 0
    %107 = vmatpush1.bf16.msra.mxu0 0
    %108 = vmatprep.subr.bf16.mxu0 0
    %109 = vmatpush1.bf16.msra.mxu0 0
    %110 = vmatprep.subr.bf16.mxu0 0
    %111 = vmatpush1.bf16.msra.mxu0 0
    %112 = vmatprep.subr.bf16.mxu0 0
    %113 = vmatpush1.bf16.msra.mxu0 0
    %114 = vmatprep.subr.bf16.mxu0 0
    %115 = vmatpush1.bf16.msra.mxu0 0
    %116 = vmatprep.subr.bf16.mxu0 0
    %117 = vmatpush1.bf16.msra.mxu0 0
    %118 = vmatprep.subr.bf16.mxu0 0
    %119 = vmatpush1.bf16.msra.mxu0 0
    %120 = vmatprep.subr.bf16.mxu0 0
    %121 = vmatpush1.bf16.msra.mxu0 0
    %122 = vmatprep.subr.bf16.mxu0 0
    %123 = vmatpush1.bf16.msra.mxu0 0
    %124 = vmatprep.subr.bf16.mxu0 0
    %125 = vmatpush1.bf16.msra.mxu0 0
    %126 = vmatprep.subr.bf16.mxu0 0
    %127 = vmatpush1.bf16.msra.mxu0 0
    %128 = vmatprep.subr.bf16.mxu0 0
    %129 = vmatpush1.bf16.msra.mxu0 0
    %130 = vmatprep.subr.bf16.mxu0 0
    %131 = vmatpush1.bf16.msra.mxu0 0
    %132 = vmatprep.subr.bf16.mxu0 0
    %133 = vmatpush1.bf16.msra.mxu0 0
    %134 = vmatprep.subr.bf16.mxu0 0
    %135 = vmatpush1.bf16.msra.mxu0 0
    %136 = vmatprep.mubr.bf16.mxu0 0
    %137 = vmatmul.mubr.bf16.gmra.mrb[0].mxu0 %v95
    %v138 = vpop.f32.mrb[0].mxu0
    %v139 = vadd.f32 0.0, %v138
    %v140 = vpop.f32.mrb[0].mxu0
    %v141 = vadd.f32 0.0, %v140
    %v142 = vpop.f32.mrb[0].mxu0
    %v143 = vpop.f32.mrb[0].mxu0
    %144 = vdwg.mxu0
    %v151 = vunpack.c.l.b16 %v77
    %v152 = vunpack.c.h.b16 %v77
    %v153 = vunpack.c.l.b16 %v78
    %v154 = vunpack.c.h.b16 %v78
    %v155 = vunpack.c.l.b16 %v79
    %v156 = vunpack.c.h.b16 %v79
    %v157 = vunpack.c.l.b16 %v80
    %v158 = vunpack.c.h.b16 %v80
    %v159 = vunpack.c.l.b16 %v81
    %v160 = vunpack.c.h.b16 %v81
    %v161 = vunpack.c.l.b16 %v82
    %v162 = vunpack.c.h.b16 %v82
    %v163 = vpack.c.b16 %v153, %v151
    %v164 = vpack.c.b16 %v154, %v152
    %v165 = vpack.c.b16 %v157, %v155
    %v166 = vpack.c.b16 %v158, %v156
    %v167 = vpack.c.b16 %v161, %v159
    %v168 = vpack.c.b16 %v162, %v160
    %vm175 = vcmask 392192
    %v177 = vsel %vm175, %v75, 0
    %179 = vmatprep.subr.bf16.mxu0 %v164
    %180 = vmatpush1.bf16.msra.mxu0 %v163
    %181 = vmatprep.subr.bf16.mxu0 %v166
    %182 = vmatpush1.bf16.msra.mxu0 %v165
    %183 = vmatprep.subr.bf16.mxu0 %v168
    %184 = vmatpush1.bf16.msra.mxu0 %v167
    %185 = vmatprep.subr.bf16.mxu0 0
    %186 = vmatpush1.bf16.msra.mxu0 0
    %187 = vmatprep.subr.bf16.mxu0 0
    %188 = vmatpush1.bf16.msra.mxu0 0
    %189 = vmatprep.subr.bf16.mxu0 0
    %190 = vmatpush1.bf16.msra.mxu0 0
    %191 = vmatprep.subr.bf16.mxu0 0
    %192 = vmatpush1.bf16.msra.mxu0 0
    %193 = vmatprep.subr.bf16.mxu0 0
    %194 = vmatpush1.bf16.msra.mxu0 0
    %195 = vmatprep.subr.bf16.mxu0 0
    %196 = vmatpush1.bf16.msra.mxu0 0
    %197 = vmatprep.subr.bf16.mxu0 0
    %198 = vmatpush1.bf16.msra.mxu0 0
    %199 = vmatprep.subr.bf16.mxu0 0
    %200 = vmatpush1.bf16.msra.mxu0 0
    %201 = vmatprep.subr.bf16.mxu0 0
    %202 = vmatpush1.bf16.msra.mxu0 0
    %203 = vmatprep.subr.bf16.mxu0 0
    %204 = vmatpush1.bf16.msra.mxu0 0
    %205 = vmatprep.subr.bf16.mxu0 0
    %206 = vmatpush1.bf16.msra.mxu0 0
    %207 = vmatprep.subr.bf16.mxu0 0
    %208 = vmatpush1.bf16.msra.mxu0 0
    %209 = vmatprep.subr.bf16.mxu0 0
    %210 = vmatpush1.bf16.msra.mxu0 0
    %211 = vmatprep.mubr.bf16.mxu0 0
    %212 = vmatmul.mubr.bf16.gmra.mrb[0].mxu0 %v177
    %v213 = vpop.f32.mrb[0].mxu0
    %v214 = vadd.f32 %v139, %v213
    %v215 = vpop.f32.mrb[0].mxu0
    %v216 = vadd.f32 %v141, %v215
    %v217 = vpop.f32.mrb[0].mxu0
    %v218 = vpop.f32.mrb[0].mxu0
    %219 = vdwg.mxu0
    %v220 = vld [vmem:[%s4] sm:$0x3]
    %v222 = vlaneseq
    %v223 = vshrl.u32 %v222, 7
    %v224 = vsub.s32 0, %v223
    %v225 = vrot.slane %v220, %v224
    %v226 = vlaneseq
    %v227 = vshrl.u32 %v226, 7
    %v228 = vsub.s32 1, %v227
    %v229 = vrot.slane %v220, %v228
    %v232 = vadd.f32 %v214, %v225
    %v233 = vadd.f32 %v216, %v229
    %v234 = vmax.f32 %v232, 0.0
    %v235 = vmax.f32 %v233, 0.0
    %v236 = vpack.c.bf16 %v234, %v234
    %v237 = vpack.c.bf16 %v235, %v235
    %v238 = vld [vmem:[#allocation5] sm:$0xff]
    %v239 = vld [vmem:[#allocation5 + $0x8] sm:$0xff]
    %v240 = vld [vmem:[#allocation5 + $0x10] sm:$0xff]
    %v241 = vld [vmem:[#allocation5 + $0x18] sm:$0xff]
    %v242 = vld [vmem:[#allocation5 + $0x20] sm:$0xff]
    %v243 = vld [vmem:[#allocation5 + $0x28] sm:$0xff]
    %v244 = vld [vmem:[#allocation5 + $0x30] sm:$0xff]
    %v245 = vld [vmem:[#allocation5 + $0x38] sm:$0xff]
    %v246 = vld [vmem:[#allocation5 + $0x40] sm:$0xff]
    %v247 = vld [vmem:[#allocation5 + $0x48] sm:$0xff]
    %v248 = vld [vmem:[#allocation5 + $0x50] sm:$0xff]
    %v249 = vld [vmem:[#allocation5 + $0x58] sm:$0xff]
    %v250 = vld [vmem:[#allocation5 + $0x60] sm:$0xff]
    %v251 = vld [vmem:[#allocation5 + $0x68] sm:$0xff]
    %v252 = vld [vmem:[#allocation5 + $0x70] sm:$0xff]
    %v253 = vld [vmem:[#allocation5 + $0x78] sm:$0xff]
    %v254 = vld [vmem:[#allocation5 + $0x80] sm:$0xff]
    %v255 = vld [vmem:[#allocation5 + $0x88] sm:$0xff]
    %v256 = vld [vmem:[#allocation5 + $0x90] sm:$0xff]
    %v257 = vld [vmem:[#allocation5 + $0x98] sm:$0xff]
    %v258 = vld [vmem:[#allocation5 + $0xa0] sm:$0xff]
    %v259 = vld [vmem:[#allocation5 + $0xa8] sm:$0xff]
    %v260 = vld [vmem:[#allocation5 + $0xb0] sm:$0xff]
    %v261 = vld [vmem:[#allocation5 + $0xb8] sm:$0xff]
    %v262 = vld [vmem:[#allocation5 + $0xc0] sm:$0xff]
    %v263 = vld [vmem:[#allocation5 + $0xc8] sm:$0xff]
    %v264 = vld [vmem:[#allocation5 + $0xd0] sm:$0xff]
    %v265 = vld [vmem:[#allocation5 + $0xd8] sm:$0xff]
    %v266 = vld [vmem:[#allocation5 + $0xe0] sm:$0xff]
    %v267 = vld [vmem:[#allocation5 + $0xe8] sm:$0xff]
    %v268 = vld [vmem:[#allocation5 + $0xf0] sm:$0xff]
    %v269 = vld [vmem:[#allocation5 + $0xf8] sm:$0xff]
    %v270 = vld [vmem:[%s6] sm:$0x3]
    %v272 = vlaneseq
    %v273 = vshrl.u32 %v272, 7
    %v274 = vsub.s32 0, %v273
    %v275 = vrot.slane %v270, %v274
    %v276 = vlaneseq
    %v277 = vshrl.u32 %v276, 7
    %v278 = vsub.s32 1, %v277
    %v279 = vrot.slane %v270, %v278
    %v314 = vunpack.c.l.b16 %v238
    %v315 = vunpack.c.h.b16 %v238
    %v316 = vunpack.c.l.b16 %v239
    %v317 = vunpack.c.h.b16 %v239
    %v318 = vunpack.c.l.b16 %v240
    %v319 = vunpack.c.h.b16 %v240
    %v320 = vunpack.c.l.b16 %v241
    %v321 = vunpack.c.h.b16 %v241
    %v322 = vunpack.c.l.b16 %v242
    %v323 = vunpack.c.h.b16 %v242
    %v324 = vunpack.c.l.b16 %v243
    %v325 = vunpack.c.h.b16 %v243
    %v326 = vunpack.c.l.b16 %v244
    %v327 = vunpack.c.h.b16 %v244
    %v328 = vunpack.c.l.b16 %v245
    %v329 = vunpack.c.h.b16 %v245
    %v330 = vunpack.c.l.b16 %v246
    %v331 = vunpack.c.h.b16 %v246
    %v332 = vunpack.c.l.b16 %v247
    %v333 = vunpack.c.h.b16 %v247
    %v334 = vunpack.c.l.b16 %v248
    %v335 = vunpack.c.h.b16 %v248
    %v336 = vunpack.c.l.b16 %v249
    %v337 = vunpack.c.h.b16 %v249
    %v338 = vunpack.c.l.b16 %v250
    %v339 = vunpack.c.h.b16 %v250
    %v340 = vunpack.c.l.b16 %v251
    %v341 = vunpack.c.h.b16 %v251
    %v342 = vunpack.c.l.b16 %v252
    %v343 = vunpack.c.h.b16 %v252
    %v344 = vunpack.c.l.b16 %v253
    %v345 = vunpack.c.h.b16 %v253
    %v346 = vunpack.c.l.b16 %v254
    %v347 = vunpack.c.h.b16 %v254
    %v348 = vunpack.c.l.b16 %v255
    %v349 = vunpack.c.h.b16 %v255
    %v350 = vunpack.c.l.b16 %v256
    %v351 = vunpack.c.h.b16 %v256
    %v352 = vunpack.c.l.b16 %v257
    %v353 = vunpack.c.h.b16 %v257
    %v354 = vunpack.c.l.b16 %v258
    %v355 = vunpack.c.h.b16 %v258
    %v356 = vunpack.c.l.b16 %v259
    %v357 = vunpack.c.h.b16 %v259
    %v358 = vunpack.c.l.b16 %v260
    %v359 = vunpack.c.h.b16 %v260
    %v360 = vunpack.c.l.b16 %v261
    %v361 = vunpack.c.h.b16 %v261
    %v362 = vunpack.c.l.b16 %v262
    %v363 = vunpack.c.h.b16 %v262
    %v364 = vunpack.c.l.b16 %v263
    %v365 = vunpack.c.h.b16 %v263
    %v366 = vunpack.c.l.b16 %v264
    %v367 = vunpack.c.h.b16 %v264
    %v368 = vunpack.c.l.b16 %v265
    %v369 = vunpack.c.h.b16 %v265
    %v370 = vunpack.c.l.b16 %v266
    %v371 = vunpack.c.h.b16 %v266
    %v372 = vunpack.c.l.b16 %v267
    %v373 = vunpack.c.h.b16 %v267
    %v374 = vunpack.c.l.b16 %v268
    %v375 = vunpack.c.h.b16 %v268
    %v376 = vunpack.c.l.b16 %v269
    %v377 = vunpack.c.h.b16 %v269
    %v378 = vpack.c.b16 %v316, %v314
    %v379 = vpack.c.b16 %v317, %v315
    %v380 = vpack.c.b16 %v320, %v318
    %v381 = vpack.c.b16 %v321, %v319
    %v382 = vpack.c.b16 %v324, %v322
    %v383 = vpack.c.b16 %v325, %v323
    %v384 = vpack.c.b16 %v328, %v326
    %v385 = vpack.c.b16 %v329, %v327
    %v386 = vpack.c.b16 %v332, %v330
    %v387 = vpack.c.b16 %v333, %v331
    %v388 = vpack.c.b16 %v336, %v334
    %v389 = vpack.c.b16 %v337, %v335
    %v390 = vpack.c.b16 %v340, %v338
    %v391 = vpack.c.b16 %v341, %v339
    %v392 = vpack.c.b16 %v344, %v342
    %v393 = vpack.c.b16 %v345, %v343
    %v394 = vpack.c.b16 %v348, %v346
    %v395 = vpack.c.b16 %v349, %v347
    %v396 = vpack.c.b16 %v352, %v350
    %v397 = vpack.c.b16 %v353, %v351
    %v398 = vpack.c.b16 %v356, %v354
    %v399 = vpack.c.b16 %v357, %v355
    %v400 = vpack.c.b16 %v360, %v358
    %v401 = vpack.c.b16 %v361, %v359
    %v402 = vpack.c.b16 %v364, %v362
    %v403 = vpack.c.b16 %v365, %v363
    %v404 = vpack.c.b16 %v368, %v366
    %v405 = vpack.c.b16 %v369, %v367
    %v406 = vpack.c.b16 %v372, %v370
    %v407 = vpack.c.b16 %v373, %v371
    %v408 = vpack.c.b16 %v376, %v374
    %v409 = vpack.c.b16 %v377, %v375
    %442 = vmatprep.subr.bf16.mxu0 %v379
    %443 = vmatpush1.bf16.msra.mxu0 %v378
    %444 = vmatprep.subr.bf16.mxu0 %v381
    %445 = vmatpush1.bf16.msra.mxu0 %v380
    %446 = vmatprep.subr.bf16.mxu0 %v383
    %447 = vmatpush1.bf16.msra.mxu0 %v382
    %448 = vmatprep.subr.bf16.mxu0 %v385
    %449 = vmatpush1.bf16.msra.mxu0 %v384
    %450 = vmatprep.subr.bf16.mxu0 %v387
    %451 = vmatpush1.bf16.msra.mxu0 %v386
    %452 = vmatprep.subr.bf16.mxu0 %v389
    %453 = vmatpush1.bf16.msra.mxu0 %v388
    %454 = vmatprep.subr.bf16.mxu0 %v391
    %455 = vmatpush1.bf16.msra.mxu0 %v390
    %456 = vmatprep.subr.bf16.mxu0 %v393
    %457 = vmatpush1.bf16.msra.mxu0 %v392
    %458 = vmatprep.subr.bf16.mxu0 %v395
    %459 = vmatpush1.bf16.msra.mxu0 %v394
    %460 = vmatprep.subr.bf16.mxu0 %v397
    %461 = vmatpush1.bf16.msra.mxu0 %v396
    %462 = vmatprep.subr.bf16.mxu0 %v399
    %463 = vmatpush1.bf16.msra.mxu0 %v398
    %464 = vmatprep.subr.bf16.mxu0 %v401
    %465 = vmatpush1.bf16.msra.mxu0 %v400
    %466 = vmatprep.subr.bf16.mxu0 %v403
    %467 = vmatpush1.bf16.msra.mxu0 %v402
    %468 = vmatprep.subr.bf16.mxu0 %v405
    %469 = vmatpush1.bf16.msra.mxu0 %v404
    %470 = vmatprep.subr.bf16.mxu0 %v407
    %471 = vmatpush1.bf16.msra.mxu0 %v406
    %472 = vmatprep.subr.bf16.mxu0 %v409
    %473 = vmatpush1.bf16.msra.mxu0 %v408
    %474 = vmatprep.mubr.bf16.mxu0 %v237
    %475 = vmatmul.mubr.bf16.gmra.mrb[0].mxu0 %v236
    %v476 = vpop.f32.mrb[0].mxu0
    %v477 = vadd.f32 %v275, %v476
    %v478 = vpop.f32.mrb[0].mxu0
    %v479 = vadd.f32 %v279, %v478
    %v480 = vpop.f32.mrb[0].mxu0
    %v481 = vpop.f32.mrb[0].mxu0
    %482 = vdwg.mxu0
    %v483 = vmax.f32 %v477, 0.0
    %v484 = vmax.f32 %v479, 0.0
    %v485 = vpack.c.bf16 %v483, %v483
    %v486 = vpack.c.bf16 %v484, %v484
    %v487 = vld [vmem:[#allocation7] sm:$0xf]
    %v488 = vld [vmem:[#allocation7 + $0x4] sm:$0xf]
    %v489 = vld [vmem:[#allocation7 + $0x8] sm:$0xf]
    %v490 = vld [vmem:[#allocation7 + $0xc] sm:$0xf]
    %v491 = vld [vmem:[#allocation7 + $0x10] sm:$0xf]
    %v492 = vld [vmem:[#allocation7 + $0x14] sm:$0xf]
    %v493 = vld [vmem:[#allocation7 + $0x18] sm:$0xf]
    %v494 = vld [vmem:[#allocation7 + $0x1c] sm:$0xf]
    %v495 = vld [vmem:[#allocation7 + $0x20] sm:$0xf]
    %v496 = vld [vmem:[#allocation7 + $0x24] sm:$0xf]
    %v497 = vld [vmem:[#allocation7 + $0x28] sm:$0xf]
    %v498 = vld [vmem:[#allocation7 + $0x2c] sm:$0xf]
    %v499 = vld [vmem:[#allocation7 + $0x30] sm:$0xf]
    %v500 = vld [vmem:[#allocation7 + $0x34] sm:$0xf]
    %v501 = vld [vmem:[#allocation7 + $0x38] sm:$0xf]
    %v502 = vld [vmem:[#allocation7 + $0x3c] sm:$0xf]
    %v503 = vld [vmem:[#allocation7 + $0x40] sm:$0xf]
    %v504 = vld [vmem:[#allocation7 + $0x44] sm:$0xf]
    %v505 = vld [vmem:[#allocation7 + $0x48] sm:$0xf]
    %v506 = vld [vmem:[#allocation7 + $0x4c] sm:$0xf]
    %v507 = vld [vmem:[#allocation7 + $0x50] sm:$0xf]
    %v508 = vld [vmem:[#allocation7 + $0x54] sm:$0xf]
    %v509 = vld [vmem:[#allocation7 + $0x58] sm:$0xf]
    %v510 = vld [vmem:[#allocation7 + $0x5c] sm:$0xf]
    %v511 = vld [vmem:[#allocation7 + $0x60] sm:$0xf]
    %v512 = vld [vmem:[#allocation7 + $0x64] sm:$0xf]
    %v513 = vld [vmem:[#allocation7 + $0x68] sm:$0xf]
    %v514 = vld [vmem:[#allocation7 + $0x6c] sm:$0xf]
    %v515 = vld [vmem:[#allocation7 + $0x70] sm:$0xf]
    %v516 = vld [vmem:[#allocation7 + $0x74] sm:$0xf]
    %v517 = vld [vmem:[#allocation7 + $0x78] sm:$0xf]
    %v518 = vld [vmem:[#allocation7 + $0x7c] sm:$0xf]
    %v519 = vld [vmem:[%s8] sm:$0x1]
    %v521 = vlaneseq
    %v522 = vshrl.u32 %v521, 7
    %v523 = vsub.s32 0, %v522
    %v524 = vrot.slane %v519, %v523
    %v558 = vunpack.c.l.b16 %v487
    %v559 = vunpack.c.l.b16 %v488
    %v560 = vunpack.c.l.b16 %v489
    %v561 = vunpack.c.l.b16 %v490
    %v562 = vunpack.c.l.b16 %v491
    %v563 = vunpack.c.l.b16 %v492
    %v564 = vunpack.c.l.b16 %v493
    %v565 = vunpack.c.l.b16 %v494
    %v566 = vunpack.c.l.b16 %v495
    %v567 = vunpack.c.l.b16 %v496
    %v568 = vunpack.c.l.b16 %v497
    %v569 = vunpack.c.l.b16 %v498
    %v570 = vunpack.c.l.b16 %v499
    %v571 = vunpack.c.l.b16 %v500
    %v572 = vunpack.c.l.b16 %v501
    %v573 = vunpack.c.l.b16 %v502
    %v574 = vunpack.c.l.b16 %v503
    %v575 = vunpack.c.l.b16 %v504
    %v576 = vunpack.c.l.b16 %v505
    %v577 = vunpack.c.l.b16 %v506
    %v578 = vunpack.c.l.b16 %v507
    %v579 = vunpack.c.l.b16 %v508
    %v580 = vunpack.c.l.b16 %v509
    %v581 = vunpack.c.l.b16 %v510
    %v582 = vunpack.c.l.b16 %v511
    %v583 = vunpack.c.l.b16 %v512
    %v584 = vunpack.c.l.b16 %v513
    %v585 = vunpack.c.l.b16 %v514
    %v586 = vunpack.c.l.b16 %v515
    %v587 = vunpack.c.l.b16 %v516
    %v588 = vunpack.c.l.b16 %v517
    %v589 = vunpack.c.l.b16 %v518
    %v590 = vpack.c.b16 %v559, %v558
    %v591 = vpack.c.b16 %v561, %v560
    %v592 = vpack.c.b16 %v563, %v562
    %v593 = vpack.c.b16 %v565, %v564
    %v594 = vpack.c.b16 %v567, %v566
    %v595 = vpack.c.b16 %v569, %v568
    %v596 = vpack.c.b16 %v571, %v570
    %v597 = vpack.c.b16 %v573, %v572
    %v598 = vpack.c.b16 %v575, %v574
    %v599 = vpack.c.b16 %v577, %v576
    %v600 = vpack.c.b16 %v579, %v578
    %v601 = vpack.c.b16 %v581, %v580
    %v602 = vpack.c.b16 %v583, %v582
    %v603 = vpack.c.b16 %v585, %v584
    %v604 = vpack.c.b16 %v587, %v586
    %v605 = vpack.c.b16 %v589, %v588
    %622 = vmatprep.subr.bf16.mxu0 0
    %623 = vmatpush1.bf16.msra.mxu0 %v590
    %624 = vmatprep.subr.bf16.mxu0 0
    %625 = vmatpush1.bf16.msra.mxu0 %v591
    %626 = vmatprep.subr.bf16.mxu0 0
    %627 = vmatpush1.bf16.msra.mxu0 %v592
    %628 = vmatprep.subr.bf16.mxu0 0
    %629 = vmatpush1.bf16.msra.mxu0 %v593
    %630 = vmatprep.subr.bf16.mxu0 0
    %631 = vmatpush1.bf16.msra.mxu0 %v594
    %632 = vmatprep.subr.bf16.mxu0 0
    %633 = vmatpush1.bf16.msra.mxu0 %v595
    %634 = vmatprep.subr.bf16.mxu0 0
    %635 = vmatpush1.bf16.msra.mxu0 %v596
    %636 = vmatprep.subr.bf16.mxu0 0
    %637 = vmatpush1.bf16.msra.mxu0 %v597
    %638 = vmatprep.subr.bf16.mxu0 0
    %639 = vmatpush1.bf16.msra.mxu0 %v598
    %640 = vmatprep.subr.bf16.mxu0 0
    %641 = vmatpush1.bf16.msra.mxu0 %v599
    %642 = vmatprep.subr.bf16.mxu0 0
    %643 = vmatpush1.bf16.msra.mxu0 %v600
    %644 = vmatprep.subr.bf16.mxu0 0
    %645 = vmatpush1.bf16.msra.mxu0 %v601
    %646 = vmatprep.subr.bf16.mxu0 0
    %647 = vmatpush1.bf16.msra.mxu0 %v602
    %648 = vmatprep.subr.bf16.mxu0 0
    %649 = vmatpush1.bf16.msra.mxu0 %v603
    %650 = vmatprep.subr.bf16.mxu0 0
    %651 = vmatpush1.bf16.msra.mxu0 %v604
    %652 = vmatprep.subr.bf16.mxu0 0
    %653 = vmatpush1.bf16.msra.mxu0 %v605
    %654 = vmatprep.mubr.bf16.mxu0 %v486
    %655 = vmatmul.mubr.bf16.gmra.mrb[0].mxu0 %v485
    %v656 = vpop.f32.mrb[0].mxu0
    %v657 = vadd.f32 %v524, %v656
    %v658 = vpop.f32.mrb[0].mxu0
    %v659 = vpop.f32.mrb[0].mxu0
    %v660 = vpop.f32.mrb[0].mxu0
    %661 = vdwg.mxu0
    %662 = vst [vmem:[#allocation8] sm:$0xff] %v657
    // Predicated region
    $region50: #{tpu_custom_call.1} parent=1 // pred_check
      _
    $region51: #{tpu_custom_call.1} parent=1 // pred_check_branch
      %664 = sbr.rel (0) target = $region53
    $region52: #{tpu_custom_call.1} parent=1 // pred_region
      %s666 = ssub.s32 128, 128
      %667 = vsyncadd [#allocation4], %s666
      %s669 = sshll.u32 [#allocation8], 4
      %s670 = int_to_ptr.vmem [resolvable:$true] %s669
      %672 = dma.vmem_to_hbm [thread:$0]  %s670, 128, %s9, [#allocation4]
    $region53: #{tpu_custom_call.1} parent=1 // pred_fallthru
      _
    // Predicated region
    $region54: #{tpu_custom_call.1} parent=1 // pred_check
      _
    $region55: #{tpu_custom_call.1} parent=1 // pred_check_branch
      %674 = sbr.rel (0) target = $region57
    $region56: #{tpu_custom_call.1} parent=1 // pred_region
      %675 = dma.done [#allocation4], 128
    $region57: #{tpu_custom_call.1} parent=1 // pred_fallthru
      _
    %676 = vsyncpa [#allocation3], 1
    %677 = vsyncpa [#allocation6], 1
    %678 = vsyncpa [#allocation4], 1

</llo_original>
